<compile_context>
chip_gen: v7x
topology: tpu7x:2x2x1
jax: 0.10.0
libtpu: 0.0.40
codegen_flags: <defaults>
</compile_context>

<pallas_src>
import functools

import jax
import jax.numpy as jnp
from jax.experimental import pallas as pl
from jax.experimental.pallas import tpu as pltpu


# ----------------------------------------------------------------------------
# helpers: generation-aware tile / VMEM selection
# ----------------------------------------------------------------------------
def _round_up(x, m):
    return (x + m - 1) // m * m


def _vmem_capacity_bytes():
    """Per-core VMEM capacity; conservative (v7x-sized) default if unknown."""
    try:
        return int(pltpu.get_tpu_info().vmem_capacity_bytes)
    except Exception:
        return 64 * 1024 * 1024


def _vmem_usage(tm, ti, H, out_bytes):
    """Rough VMEM footprint of the grouped MoE kernel for given tiles."""
    bf16, f32 = 2, 4
    y_blk = 2 * tm * H * bf16                    # double-buffered row tile
    gup_blk = 2 * H * (2 * ti) * bf16            # fused gate|up weight tile
    dwn_blk = 2 * ti * H * bf16                  # down weight tile
    w_blk = 2 * tm * 128 * f32                   # per-row weight (lane padded)
    out_blk = 2 * tm * H * out_bytes             # output tile
    acc = tm * H * f32                           # scratch accumulator
    temps = tm * (2 * ti) * f32 + 3 * tm * ti * f32 + tm * H * f32
    return y_blk + gup_blk + dwn_blk + w_blk + out_blk + acc + temps + (2 << 20)


def _choose_tiles(M, H, I, out_bytes, budget):
    """Prefer large row tiles (arithmetic intensity == tm), then large
    intermediate tiles, under the per-generation VMEM budget."""
    ti_cands = [c for c in (1024, 512, 256, 128) if I % c == 0] or [I]
    tm_cap = max(8, _round_up(min(M, 512), 8))
    tm_cands = [c for c in (512, 384, 256, 128, 64, 32, 16, 8) if c <= tm_cap]
    for tm in tm_cands:
        for ti in ti_cands:
            if _vmem_usage(tm, ti, H, out_bytes) <= budget:
                return tm, ti
    return tm_cands[-1], ti_cands[-1]


# ----------------------------------------------------------------------------
# Router logits kernel: logits = y @ W_router   (tiled over tokens)
# ----------------------------------------------------------------------------
def _router_kernel(y_ref, w_ref, o_ref):
    o_ref[...] = jnp.dot(y_ref[...], w_ref[...],
                         preferred_element_type=jnp.float32)


def _router_logits(y, w_router, tm_r, vmem_limit):
    T_pad, H = y.shape
    E = w_router.shape[1]
    return pl.pallas_call(
        _router_kernel,
        out_shape=jax.ShapeDtypeStruct((T_pad, E), jnp.float32),
        grid_spec=pl.GridSpec(
            grid=(T_pad // tm_r,),
            in_specs=[pl.BlockSpec((tm_r, H), lambda t: (t, 0)),
                      pl.BlockSpec((H, E), lambda t: (0, 0))],
            out_specs=pl.BlockSpec((tm_r, E), lambda t: (t, 0))),
        compiler_params=pltpu.CompilerParams(
            dimension_semantics=("parallel",),
            vmem_limit_bytes=vmem_limit),
    )(y, w_router)


# ----------------------------------------------------------------------------
# Grouped-GEMM expert kernel.  Grid = (row_tile, I_tile); each row tile holds
# rows of exactly one expert (groups padded to tm), whose index is scalar-
# prefetched.  Padding rows carry routing weight 0, so they contribute zero.
# ----------------------------------------------------------------------------
def _moe_kernel(eff_ref, act_ref, y_ref, gup_ref, dwn_ref, w_ref, o_ref,
                acc_ref, *, ti):
    t = pl.program_id(0)
    i = pl.program_id(1)
    n_i = pl.num_programs(1)

    @pl.when(i == 0)
    def _():
        acc_ref[...] = jnp.zeros_like(acc_ref)

    @pl.when(act_ref[t] > 0)
    def _():
        y = y_ref[...]                                        # (tm, H) bf16
        gu = jnp.dot(y, gup_ref[...],
                     preferred_element_type=jnp.float32)      # (tm, 2*ti) f32
        g = gu[:, :ti]
        u = gu[:, ti:]
        # routing weight (and padding-row mask, weight == 0) folded into the
        # narrow (tm, ti) activation instead of the wide (tm, H) result.
        a = (g * jax.nn.sigmoid(g)) * u * w_ref[...]
        acc_ref[...] += jnp.dot(a.astype(jnp.bfloat16), dwn_ref[...],
                                preferred_element_type=jnp.float32)

    @pl.when(i == n_i - 1)
    def _():
        o_ref[...] = acc_ref[...].astype(o_ref.dtype)


def _moe_grouped(eff_expert, active, y_sorted, gup_w, down_w, w_sorted, *,
                 tm, ti, out_dtype, vmem_limit):
    M_cap, H = y_sorted.shape
    n_i = gup_w.shape[1]
    n_tiles = M_cap // tm

    def _wi(i, act_t):
        # freeze the weight block index on inactive (pure padding) tail tiles
        # so no weight DMA is issued for them.
        return i * act_t + (n_i - 1) * (1 - act_t)

    return pl.pallas_call(
        functools.partial(_moe_kernel, ti=ti),
        out_shape=jax.ShapeDtypeStruct((M_cap, H), out_dtype),
        grid_spec=pltpu.PrefetchScalarGridSpec(
            num_scalar_prefetch=2,
            grid=(n_tiles, n_i),
            in_specs=[
                pl.BlockSpec((tm, H), lambda t, i, eff, act: (t, 0)),
                pl.BlockSpec((None, None, H, 2 * ti),
                             lambda t, i, eff, act:
                             (eff[t], _wi(i, act[t]), 0, 0)),
                pl.BlockSpec((None, ti, H),
                             lambda t, i, eff, act:
                             (eff[t], _wi(i, act[t]), 0)),
                pl.BlockSpec((tm, 1), lambda t, i, eff, act: (t, 0)),
            ],
            out_specs=pl.BlockSpec((tm, H), lambda t, i, eff, act: (t, 0)),
            scratch_shapes=[pltpu.VMEM((tm, H), jnp.float32)],
        ),
        compiler_params=pltpu.CompilerParams(
            dimension_semantics=("parallel", "arbitrary"),
            vmem_limit_bytes=vmem_limit),
    )(eff_expert, active, y_sorted, gup_w, down_w, w_sorted)


# ----------------------------------------------------------------------------
# Full forward pass (routing_std, bsz > 1, silu activation, no shared experts).
# ----------------------------------------------------------------------------
@functools.partial(jax.jit, static_argnames=("num_experts_per_tok",))
def block_sparse_mlp_forward(x, w_router, gate_w, up_w, down_w,
                             num_experts_per_tok):
    H = x.shape[-1]
    E, _, I = gate_w.shape
    K = num_experts_per_tok
    out_dtype = x.dtype if x.dtype in (jnp.bfloat16, jnp.float32) else jnp.float32
    out_bytes = jnp.dtype(out_dtype).itemsize

    y = x.reshape(-1, H)
    T = y.shape[0]

    tm_r = min(256, _round_up(T, 8))
    T_pad = _round_up(T, tm_r)
    M = T_pad * K

    cap = _vmem_capacity_bytes()
    tm, ti = _choose_tiles(M, H, I, out_bytes, int(cap * 0.85))
    vmem_limit = int(min(cap * 0.9,
                         max(_vmem_usage(tm, ti, H, out_bytes) + (4 << 20),
                             32 << 20)))

    # ---- routing ("std"): logits -> top-k -> softmax over the top-k values --
    r_dtype = jnp.bfloat16 if x.dtype == jnp.bfloat16 else jnp.float32
    y_pad = jnp.pad(y.astype(jnp.float32), ((0, T_pad - T), (0, 0)))
    logits = _router_logits(y_pad.astype(r_dtype), w_router.astype(r_dtype),
                            tm_r, vmem_limit)                     # [Tp, E]
    # TODO(synk): torch.topk has no Pallas primitive; routing glue in plain JAX.
    topk_vals, topk_idx = jax.lax.top_k(logits, K)                # [Tp, K]
    rweights = jax.nn.softmax(topk_vals, axis=-1)
    valid = (jnp.arange(T_pad) < T).astype(rweights.dtype)
    rweights = rweights * valid[:, None]          # zero the padded tokens

    # ---- grouped-GEMM layout: sort assignments by expert, pad groups to tm --
    flat_exp = topk_idx.reshape(-1).astype(jnp.int32)             # [M]
    flat_w = rweights.reshape(-1).astype(jnp.float32)
    flat_tok = jnp.repeat(jnp.arange(T_pad, dtype=jnp.int32), K)

    order = jnp.argsort(flat_exp)
    s_exp = flat_exp[order]
    s_tok = flat_tok[order]
    s_w = flat_w[order]

    sizes = jnp.bincount(flat_exp, length=E).astype(jnp.int32)    # [E]
    cum_excl = jnp.cumsum(sizes) - sizes
    padded = ((sizes + tm - 1) // tm) * tm
    pad_start = jnp.cumsum(padded) - padded
    total_used = jnp.sum(padded)

    dest = jnp.arange(M, dtype=jnp.int32) - cum_excl[s_exp] + pad_start[s_exp]

    M_cap = _round_up(M, tm) + E * tm             # static upper bound
    n_tiles = M_cap // tm

    tok_map = jnp.zeros((M_cap,), jnp.int32).at[dest].set(s_tok)
    w_map = jnp.zeros((M_cap,), jnp.float32).at[dest].set(s_w)
    exp_map = jnp.zeros((M_cap,), jnp.int32).at[dest].set(s_exp)

    tile_first = jnp.arange(n_tiles, dtype=jnp.int32) * tm
    tile_expert = exp_map[tile_first]   # first row of every group tile is real
    active = (tile_first < total_used).astype(jnp.int32)
    last_active = jnp.maximum(total_used // tm - 1, 0)
    eff_expert = jnp.where(active == 1, tile_expert,
                           tile_expert[last_active]).astype(jnp.int32)

    y_sorted = y_pad.astype(jnp.bfloat16)[tok_map]                # [M_cap, H]
    w_sorted = w_map[:, None]                                     # [M_cap, 1]

    # ---- weight prep (would be hoisted to load time in a real model) --------
    n_i = I // ti
    gup_w = jnp.concatenate(
        [gate_w.astype(jnp.bfloat16).reshape(E, H, n_i, ti),
         up_w.astype(jnp.bfloat16).reshape(E, H, n_i, ti)], axis=-1)
    gup_w = jnp.transpose(gup_w, (0, 2, 1, 3))                    # [E,nI,H,2ti]
    dwn_w = down_w.astype(jnp.bfloat16)                           # [E, I, H]

    o_sorted = _moe_grouped(eff_expert, active, y_sorted, gup_w, dwn_w,
                            w_sorted, tm=tm, ti=ti, out_dtype=out_dtype,
                            vmem_limit=vmem_limit)                # [M_cap, H]

    # scatter-add per-assignment results back to tokens (K rows per token;
    # padding rows carry weight 0 and land harmlessly on token 0).
    out = jnp.zeros((T_pad, H), jnp.float32).at[tok_map].add(
        o_sorted.astype(jnp.float32))
    return out[:T].reshape(x.shape).astype(x.dtype)


# ----------------------------------------------------------------------------
# Pure-JAX f32 reference (mirrors the torch expert loop) for a sanity check.
# ----------------------------------------------------------------------------
def reference_forward(x, w_router, gate_w, up_w, down_w, k):
    H = x.shape[-1]
    E = w_router.shape[1]
    y = x.reshape(-1, H).astype(jnp.float32)
    logits = y @ w_router
    topk_vals, topk_idx = jax.lax.top_k(logits, k)
    rw = jax.nn.softmax(topk_vals, axis=-1)
    out = jnp.zeros_like(y)
    for e in range(E):
        g = y @ gate_w[e]
        u = y @ up_w[e]
        a = (g * jax.nn.sigmoid(g)) * u
        d = a @ down_w[e]
        w_e = jnp.sum(jnp.where(topk_idx == e, rw, 0.0), axis=-1)
        out = out + d * w_e[:, None]
    return out.reshape(x.shape)


if __name__ == "__main__":
    B, S = 2, 4
    hidden_size = 32
    intermediate_size = 64
    num_experts = 4
    num_experts_per_tok = 2

    key = jax.random.PRNGKey(0)
    kx, kr, kg, ku, kd = jax.random.split(key, 5)

    x = jax.random.normal(kx, (B, S, hidden_size), dtype=jnp.float32)
    w_router = jax.random.normal(kr, (hidden_size, num_experts),
                                 dtype=jnp.float32) * 0.05
    gate_w = jax.random.normal(kg, (num_experts, hidden_size,
                                    intermediate_size), dtype=jnp.float32) * 0.05
    up_w = jax.random.normal(ku, (num_experts, hidden_size,
                                  intermediate_size), dtype=jnp.float32) * 0.05
    down_w = jax.random.normal(kd, (num_experts, intermediate_size,
                                    hidden_size), dtype=jnp.float32) * 0.05

    out = block_sparse_mlp_forward(x, w_router, gate_w, up_w, down_w,
                                   num_experts_per_tok)
    out = jax.block_until_ready(out)

    ref = reference_forward(x, w_router, gate_w, up_w, down_w,
                            num_experts_per_tok)
    assert out.shape == x.shape and out.dtype == x.dtype
    # bf16 operands / f32 accumulate vs f32 reference -> modest tolerance.
    assert jnp.allclose(out, ref, atol=2e-2, rtol=2e-2), (
        float(jnp.max(jnp.abs(out - ref))))

    print("KERNEL_OK")
</pallas_src>

<mosaic_0001>
module attributes {stable_mosaic.version = 11 : i64} {
  func.func private @main(%arg0: i32) attributes {dimension_semantics = [#tpu.dimension_semantics<core_parallel>], iteration_bounds = array<i64: 2>, tpu.core_type = #tpu.core_type<sc_scalar_subcore>, window_params = []} {
    return
  }
}

module attributes {stable_mosaic.version = 11 : i64} {
  func.func private @main(%arg0: i32) attributes {dimension_semantics = [#tpu.dimension_semantics<core_parallel>], iteration_bounds = array<i64: 2>, tpu.core_type = #tpu.core_type<sc_scalar_subcore>, window_params = []} {
    return
  }
}

module attributes {stable_mosaic.version = 11 : i64} {
  func.func @_router_kernel(%arg0: i32, %arg1: memref<8x32xf32, #tpu.memory_space<vmem>>, %arg2: memref<32x4xf32, #tpu.memory_space<vmem>>, %arg3: memref<8x4xf32, #tpu.memory_space<vmem>>) attributes {dimension_semantics = [#tpu.dimension_semantics<parallel>], iteration_bounds = array<i64: 1>, scalar_prefetch = 0 : i64, scratch_operands = 0 : i64, tpu.core_type = #tpu.core_type<tc>, window_params = [{transform_indices = @transform_0, window_bounds = array<i64: 8, 32>}, {pipeline_mode = #tpu.pipeline_mode<synchronous>, transform_indices = @transform_1, window_bounds = array<i64: 32, 4>}, {transform_indices = @transform_2, window_bounds = array<i64: 8, 4>}]} {
    %c0 = arith.constant 0 : index
    %c0_0 = arith.constant 0 : index
    %0 = vector.load %arg1[%c0, %c0_0] : memref<8x32xf32, #tpu.memory_space<vmem>>, vector<8x32xf32>
    %c0_1 = arith.constant 0 : index
    %c0_2 = arith.constant 0 : index
    %1 = vector.load %arg2[%c0_1, %c0_2] : memref<32x4xf32, #tpu.memory_space<vmem>>, vector<32x4xf32>
    %cst = arith.constant dense<0.000000e+00> : vector<8x4xf32>
    %2 = tpu.matmul %0, %1, %cst {dimension_numbers = #tpu.dot_dimension_numbers<[1], [0], [0], [1], [0, 0, 1, 1], [], []>} : vector<8x32xf32>, vector<32x4xf32>, vector<8x4xf32> -> vector<8x4xf32>
    %c0_3 = arith.constant 0 : index
    %c0_4 = arith.constant 0 : index
    %3 = vector.load %arg3[%c0_3, %c0_4] : memref<8x4xf32, #tpu.memory_space<vmem>>, vector<8x4xf32>
    tpu.vector_store %arg3[%c0_3, %c0_4], %2 {strides = array<i32>} : memref<8x4xf32, #tpu.memory_space<vmem>>, vector<8x4xf32>,
    return
  }
  func.func @transform_0(%arg0: i32) -> (i32, i32) {
    %c0_i32 = arith.constant 0 : i32
    %c0_i32_0 = arith.constant 0 : i32
    return %arg0, %c0_i32 : i32, i32
  }
  func.func @transform_1(%arg0: i32) -> (i32, i32) {
    %c0_i32 = arith.constant 0 : i32
    %c0_i32_0 = arith.constant 0 : i32
    %c0_i32_1 = arith.constant 0 : i32
    return %c0_i32, %c0_i32_0 : i32, i32
  }
  func.func @transform_2(%arg0: i32) -> (i32, i32) {
    %c0_i32 = arith.constant 0 : i32
    %c0_i32_0 = arith.constant 0 : i32
    return %arg0, %c0_i32 : i32, i32
  }
}

module attributes {stable_mosaic.version = 11 : i64} {
  func.func @_moe_kernel(%arg0: i32, %arg1: i32, %arg2: memref<5xi32, #tpu.memory_space<smem>>, %arg3: memref<5xi32, #tpu.memory_space<smem>>, %arg4: memref<16x32xbf16, #tpu.memory_space<vmem>>, %arg5: memref<1x1x32x128xbf16, #tpu.memory_space<vmem>>, %arg6: memref<1x64x32xbf16, #tpu.memory_space<vmem>>, %arg7: memref<16x1xf32, #tpu.memory_space<vmem>>, %arg8: memref<16x32xf32, #tpu.memory_space<vmem>>, %arg9: memref<16x32xf32, #tpu.memory_space<vmem>>) attributes {dimension_semantics = [#tpu.dimension_semantics<parallel>, #tpu.dimension_semantics<arbitrary>], iteration_bounds = array<i64: 5, 1>, scalar_prefetch = 2 : i64, scratch_operands = 1 : i64, tpu.core_type = #tpu.core_type<tc>, window_params = [{transform_indices = @transform_0, window_bounds = array<i64: 16, 32>}, {transform_indices = @transform_1, window_bounds = array<i64: 1, 1, 32, 128>}, {transform_indices = @transform_2, window_bounds = array<i64: 1, 64, 32>}, {transform_indices = @transform_3, window_bounds = array<i64: 16, 1>}, {transform_indices = @transform_4, window_bounds = array<i64: 16, 32>}]} {
    %c0_i32 = arith.constant 0 : i32
    %0 = arith.cmpi eq, %arg1, %c0_i32 : i32
    %1 = arith.extui %0 : i1 to i32
    %c0_i32_0 = arith.constant 0 : i32
    %2 = arith.cmpi ne, %1, %c0_i32_0 : i32
    scf.if %2 {
      %cst = arith.constant 0.000000e+00 : f32
      %11 = vector.broadcast %cst : f32 to vector<16x32xf32>
      %c0 = arith.constant 0 : index
      %c0_5 = arith.constant 0 : index
      %12 = vector.load %arg9[%c0, %c0_5] : memref<16x32xf32, #tpu.memory_space<vmem>>, vector<16x32xf32>
      tpu.vector_store %arg9[%c0, %c0_5], %11 {strides = array<i32>} : memref<16x32xf32, #tpu.memory_space<vmem>>, vector<16x32xf32>,
    } else {
    }
    %3 = arith.index_cast %arg0 : i32 to index
    %4 = memref.load %arg3[%3] : memref<5xi32, #tpu.memory_space<smem>>
    %c0_i32_1 = arith.constant 0 : i32
    %5 = arith.cmpi sgt, %4, %c0_i32_1 : i32
    %6 = arith.extui %5 : i1 to i32
    %c0_i32_2 = arith.constant 0 : i32
    %7 = arith.cmpi ne, %6, %c0_i32_2 : i32
    scf.if %7 {
      %c0 = arith.constant 0 : index
      %c0_5 = arith.constant 0 : index
      %11 = vector.load %arg4[%c0, %c0_5] : memref<16x32xbf16, #tpu.memory_space<vmem>>, vector<16x32xbf16>
      %c0_6 = arith.constant 0 : index
      %c0_7 = arith.constant 0 : index
      %c0_8 = arith.constant 0 : index
      %c0_9 = arith.constant 0 : index
      %12 = vector.load %arg5[%c0_6, %c0_7, %c0_8, %c0_9] : memref<1x1x32x128xbf16, #tpu.memory_space<vmem>>, vector<1x1x32x128xbf16>
      %13 = vector.shape_cast %12 : vector<1x1x32x128xbf16> to vector<32x128xbf16>
      %cst = arith.constant dense<0.000000e+00> : vector<16x128xf32>
      %14 = tpu.matmul %11, %13, %cst {dimension_numbers = #tpu.dot_dimension_numbers<[1], [0], [0], [1], [0, 0, 1, 1], [], []>} : vector<16x32xbf16>, vector<32x128xbf16>, vector<16x128xf32> -> vector<16x128xf32>
      %15 = vector.extract_strided_slice %14 {offsets = [0, 0], sizes = [16, 64], strides = [1, 1]} : vector<16x128xf32> to vector<16x64xf32>
      %16 = vector.extract_strided_slice %14 {offsets = [0, 64], sizes = [16, 64], strides = [1, 1]} : vector<16x128xf32> to vector<16x64xf32>
      %17 = arith.negf %15 : vector<16x64xf32>
      %18 = math.exp %17 : vector<16x64xf32>
      %cst_10 = arith.constant 1.000000e+00 : f32
      %19 = vector.broadcast %cst_10 : f32 to vector<16x64xf32>
      %20 = arith.addf %19, %18 : vector<16x64xf32>
      %21 = arith.divf %19, %20 : vector<16x64xf32>
      %22 = arith.mulf %15, %21 : vector<16x64xf32>
      %23 = arith.mulf %22, %16 : vector<16x64xf32>
      %c0_11 = arith.constant 0 : index
      %c0_12 = arith.constant 0 : index
      %24 = vector.load %arg7[%c0_11, %c0_12] : memref<16x1xf32, #tpu.memory_space<vmem>>, vector<16x1xf32>
      %25 = vector.broadcast %24 : vector<16x1xf32> to vector<16x64xf32>
      %26 = arith.mulf %23, %25 : vector<16x64xf32>
      %c0_13 = arith.constant 0 : index
      %c0_14 = arith.constant 0 : index
      %27 = vector.load %arg9[%c0_13, %c0_14] : memref<16x32xf32, #tpu.memory_space<vmem>>, vector<16x32xf32>
      %28 = arith.truncf %26 : vector<16x64xf32> to vector<16x64xbf16>
      %c0_15 = arith.constant 0 : index
      %c0_16 = arith.constant 0 : index
      %c0_17 = arith.constant 0 : index
      %29 = vector.load %arg6[%c0_15, %c0_16, %c0_17] : memref<1x64x32xbf16, #tpu.memory_space<vmem>>, vector<1x64x32xbf16>
      %30 = vector.shape_cast %29 : vector<1x64x32xbf16> to vector<64x32xbf16>
      %cst_18 = arith.constant dense<0.000000e+00> : vector<16x32xf32>
      %31 = tpu.matmul %28, %30, %cst_18 {dimension_numbers = #tpu.dot_dimension_numbers<[1], [0], [0], [1], [0, 0, 1, 1], [], []>} : vector<16x64xbf16>, vector<64x32xbf16>, vector<16x32xf32> -> vector<16x32xf32>
      %32 = arith.addf %27, %31 : vector<16x32xf32>
      %c0_19 = arith.constant 0 : index
      %c0_20 = arith.constant 0 : index
      %33 = vector.load %arg9[%c0_19, %c0_20] : memref<16x32xf32, #tpu.memory_space<vmem>>, vector<16x32xf32>
      tpu.vector_store %arg9[%c0_19, %c0_20], %32 {strides = array<i32>} : memref<16x32xf32, #tpu.memory_space<vmem>>, vector<16x32xf32>,
    } else {
    }
    %c0_i32_3 = arith.constant 0 : i32
    %8 = arith.cmpi eq, %arg1, %c0_i32_3 : i32
    %9 = arith.extui %8 : i1 to i32
    %c0_i32_4 = arith.constant 0 : i32
    %10 = arith.cmpi ne, %9, %c0_i32_4 : i32
    scf.if %10 {
      %c0 = arith.constant 0 : index
      %c0_5 = arith.constant 0 : index
      %11 = vector.load %arg9[%c0, %c0_5] : memref<16x32xf32, #tpu.memory_space<vmem>>, vector<16x32xf32>
      %c0_6 = arith.constant 0 : index
      %c0_7 = arith.constant 0 : index
      %12 = vector.load %arg8[%c0_6, %c0_7] : memref<16x32xf32, #tpu.memory_space<vmem>>, vector<16x32xf32>
      tpu.vector_store %arg8[%c0_6, %c0_7], %11 {strides = array<i32>} : memref<16x32xf32, #tpu.memory_space<vmem>>, vector<16x32xf32>,
    } else {
    }
    return
  }
  func.func @transform_0(%arg0: i32, %arg1: i32, %arg2: memref<5xi32, #tpu.memory_space<smem>>, %arg3: memref<5xi32, #tpu.memory_space<smem>>) -> (i32, i32) {
    %c0_i32 = arith.constant 0 : i32
    %c0_i32_0 = arith.constant 0 : i32
    return %arg0, %c0_i32 : i32, i32
  }
  func.func @transform_1(%arg0: i32, %arg1: i32, %arg2: memref<5xi32, #tpu.memory_space<smem>>, %arg3: memref<5xi32, #tpu.memory_space<smem>>) -> (i32, i32, i32, i32) {
    %0 = arith.index_cast %arg0 : i32 to index
    %1 = memref.load %arg2[%0] : memref<5xi32, #tpu.memory_space<smem>>
    %2 = arith.index_cast %arg0 : i32 to index
    %3 = memref.load %arg3[%2] : memref<5xi32, #tpu.memory_space<smem>>
    %4 = arith.muli %arg1, %3 : i32
    %c1_i32 = arith.constant 1 : i32
    %5 = arith.subi %c1_i32, %3 : i32
    %c0_i32 = arith.constant 0 : i32
    %6 = arith.muli %c0_i32, %5 : i32
    %7 = arith.addi %4, %6 : i32
    %c0_i32_0 = arith.constant 0 : i32
    %c0_i32_1 = arith.constant 0 : i32
    %c0_i32_2 = arith.constant 0 : i32
    return %1, %7, %c0_i32_0, %c0_i32_1 : i32, i32, i32, i32
  }
  func.func @transform_2(%arg0: i32, %arg1: i32, %arg2: memref<5xi32, #tpu.memory_space<smem>>, %arg3: memref<5xi32, #tpu.memory_space<smem>>) -> (i32, i32, i32) {
    %0 = arith.index_cast %arg0 : i32 to index
    %1 = memref.load %arg2[%0] : memref<5xi32, #tpu.memory_space<smem>>
    %2 = arith.index_cast %arg0 : i32 to index
    %3 = memref.load %arg3[%2] : memref<5xi32, #tpu.memory_space<smem>>
    %4 = arith.muli %arg1, %3 : i32
    %c1_i32 = arith.constant 1 : i32
    %5 = arith.subi %c1_i32, %3 : i32
    %c0_i32 = arith.constant 0 : i32
    %6 = arith.muli %c0_i32, %5 : i32
    %7 = arith.addi %4, %6 : i32
    %c0_i32_0 = arith.constant 0 : i32
    %c0_i32_1 = arith.constant 0 : i32
    return %1, %7, %c0_i32_0 : i32, i32, i32
  }
  func.func @transform_3(%arg0: i32, %arg1: i32, %arg2: memref<5xi32, #tpu.memory_space<smem>>, %arg3: memref<5xi32, #tpu.memory_space<smem>>) -> (i32, i32) {
    %c0_i32 = arith.constant 0 : i32
    %c0_i32_0 = arith.constant 0 : i32
    return %arg0, %c0_i32 : i32, i32
  }
  func.func @transform_4(%arg0: i32, %arg1: i32, %arg2: memref<5xi32, #tpu.memory_space<smem>>, %arg3: memref<5xi32, #tpu.memory_space<smem>>) -> (i32, i32) {
    %c0_i32 = arith.constant 0 : i32
    %c0_i32_0 = arith.constant 0 : i32
    return %arg0, %c0_i32 : i32, i32
  }
}

</mosaic_0001>

<llo_original>
// kernel: block_sparse_mlp_forward.2
$region0: #{block_sparse_mlp_forward.2}
  #allocation0 [shape = 'u32[]', space=smem, size = 0x4, offset = 0x4, fixed_abs, tag = 'smem constant byte address 0x4 - core index']
  #allocation1 [shape = 'u32[144,128]{1,0:T(1,128)}', space=vmem, size = 0x12000, scoped, tag = 'internal scratch']
  %s0 = inlined_call_operand.vmem [shape: f32[8,32], index: 0, kind: input, shape index: {}]
  %s1 = inlined_call_operand.vmem [shape: f32[32,4], index: 1, kind: input, shape index: {}]
  %s2 = inlined_call_operand.vmem [shape: f32[8,4], index: 2, kind: output, shape index: {}]
  %s3 = sld [smem:[#allocation0]]
  $region18: #{block_sparse_mlp_forward.2} parent=0
    _
  %s5 = ssub.s32 1, %s3
  %s6 = scalar_select 0, %s5, %s3
  // Predicated region
  $region2: #{block_sparse_mlp_forward.2} parent=0 // pred_check
    _
  $region3: #{block_sparse_mlp_forward.2} parent=0 // pred_check_branch
    %8 = sbr.rel (0) target = $region5
  $region4: #{block_sparse_mlp_forward.2} parent=0 // pred_region
    _
  $region5: #{block_sparse_mlp_forward.2} parent=0 // pred_fallthru
    _
  // Predicated region
  $region6: #{block_sparse_mlp_forward.2} parent=0 // pred_check
    _
  $region7: #{block_sparse_mlp_forward.2} parent=0 // pred_check_branch
    %10 = sbr.rel (0) target = $region9
  $region8: #{block_sparse_mlp_forward.2} parent=0 // pred_region
    _
  $region9: #{block_sparse_mlp_forward.2} parent=0 // pred_fallthru
    _
  %v11 = vld [vmem:[%s0] sm:$0xff]
  %v12 = vld [vmem:[%s1] sm:$0xff]
  %v13 = vld [vmem:[%s1 + $0x8] sm:$0xff]
  %v14 = vld [vmem:[%s1 + $0x10] sm:$0xff]
  %v15 = vld [vmem:[%s1 + $0x18] sm:$0xff]
  %vm16 = vcmask 261120
  %v18 = vsel %vm16, %v11, 0
  %20 = vmatprep.subr.mxu0 0.0
  %21 = vmatpush1.msra.mxu0 %v12
  %22 = vmatprep.subr.mxu0 0.0
  %23 = vmatpush1.msra.mxu0 %v13
  %24 = vmatprep.subr.mxu0 0.0
  %25 = vmatpush1.msra.mxu0 %v14
  %26 = vmatprep.subr.mxu0 0.0
  %27 = vmatpush1.msra.mxu0 %v15
  %28 = vmatprep.subr.mxu0 0.0
  %29 = vmatpush1.msra.mxu0 0.0
  %30 = vmatprep.subr.mxu0 0.0
  %31 = vmatpush1.msra.mxu0 0.0
  %32 = vmatprep.subr.mxu0 0.0
  %33 = vmatpush1.msra.mxu0 0.0
  %34 = vmatprep.subr.mxu0 0.0
  %35 = vmatpush1.msra.mxu0 0.0
  %36 = vmatprep.subr.mxu0 0.0
  %37 = vmatpush1.msra.mxu0 0.0
  %38 = vmatprep.subr.mxu0 0.0
  %39 = vmatpush1.msra.mxu0 0.0
  %40 = vmatprep.subr.mxu0 0.0
  %41 = vmatpush1.msra.mxu0 0.0
  %42 = vmatprep.subr.mxu0 0.0
  %43 = vmatpush1.msra.mxu0 0.0
  %44 = vmatprep.subr.mxu0 0.0
  %45 = vmatpush1.msra.mxu0 0.0
  %46 = vmatprep.subr.mxu0 0.0
  %47 = vmatpush1.msra.mxu0 0.0
  %48 = vmatprep.subr.mxu0 0.0
  %49 = vmatpush1.msra.mxu0 0.0
  %50 = vmatprep.subr.mxu0 0.0
  %51 = vmatpush1.msra.mxu0 0.0
  %52 = vmatprep.subr.mxu0 0.0
  %53 = vmatpush1.msra.mxu0 0.0
  %54 = vmatprep.subr.mxu0 0.0
  %55 = vmatpush1.msra.mxu0 0.0
  %56 = vmatprep.subr.mxu0 0.0
  %57 = vmatpush1.msra.mxu0 0.0
  %58 = vmatprep.subr.mxu0 0.0
  %59 = vmatpush1.msra.mxu0 0.0
  %60 = vmatprep.subr.mxu0 0.0
  %61 = vmatpush1.msra.mxu0 0.0
  %62 = vmatprep.subr.mxu0 0.0
  %63 = vmatpush1.msra.mxu0 0.0
  %64 = vmatprep.subr.mxu0 0.0
  %65 = vmatpush1.msra.mxu0 0.0
  %66 = vmatprep.subr.mxu0 0.0
  %67 = vmatpush1.msra.mxu0 0.0
  %68 = vmatprep.subr.mxu0 0.0
  %69 = vmatpush1.msra.mxu0 0.0
  %70 = vmatprep.subr.mxu0 0.0
  %71 = vmatpush1.msra.mxu0 0.0
  %72 = vmatprep.subr.mxu0 0.0
  %73 = vmatpush1.msra.mxu0 0.0
  %74 = vmatprep.subr.mxu0 0.0
  %75 = vmatpush1.msra.mxu0 0.0
  %76 = vmatprep.subr.mxu0 0.0
  %77 = vmatpush1.msra.mxu0 0.0
  %78 = vmatprep.subr.mxu0 0.0
  %79 = vmatpush1.msra.mxu0 0.0
  %80 = vmatprep.subr.mxu0 0.0
  %81 = vmatpush1.msra.mxu0 0.0
  %82 = vmatprep.subr.mxu0 0.0
  %83 = vmatpush1.msra.mxu0 0.0
  %84 = vmatprep.mubr.f32.mxu0 0.0
  %85 = vmatmul.mubr.f32.gmra.mrb[0].mxu0 %v18
  %v86 = vpop.f32.mrb[0].mxu0
  %v87 = vadd.f32 0.0, %v86
  %v88 = vpop.f32.mrb[0].mxu0
  %89 = vdwg.mxu0
  %vm90 = vcmask 31744
  %91 = vst.msk [vmem:[%s2] sm:$0xff] %vm90, %v87
  // Predicated region
  $region10: #{block_sparse_mlp_forward.2} parent=0 // pred_check
    _
  $region11: #{block_sparse_mlp_forward.2} parent=0 // pred_check_branch
    %93 = sbr.rel (0) target = $region13
  $region12: #{block_sparse_mlp_forward.2} parent=0 // pred_region
    _
  $region13: #{block_sparse_mlp_forward.2} parent=0 // pred_fallthru
    _
  // Predicated region
  $region14: #{block_sparse_mlp_forward.2} parent=0 // pred_check
    _
  $region15: #{block_sparse_mlp_forward.2} parent=0 // pred_check_branch
    %95 = sbr.rel (0) target = $region17
  $region16: #{block_sparse_mlp_forward.2} parent=0 // pred_region
    _
  $region17: #{block_sparse_mlp_forward.2} parent=0 // pred_fallthru
    _

// kernel: block_sparse_mlp_forward.3
$region0: #{block_sparse_mlp_forward.3}
  #allocation0 [shape = 'u32[]', space=smem, size = 0x4, offset = 0x4, fixed_abs, tag = 'smem constant byte address 0x4 - core index']
  #allocation1 [shape = 'u32[144,128]{1,0:T(1,128)}', space=vmem, size = 0x12000, scoped, tag = 'internal scratch']
  #allocation2 [shape = 'f32[16,32]{1,0:T(8,128)}', space=vmem, size = 0x2000, scoped, tag = 'scratch operand']
  #allocation3 [shape = 's32[1]{0}', space=sflag, size = 0x4, scoped, tag = 'scoped memory for block_sparse_mlp_forward.3']
  #allocation4 [shape = 'u8[512]{0}', space=smem, size = 0x200, scoped, tag = 'prefetched SMEM operand 0']
  #allocation5 [shape = 'u8[512]{0}', space=smem, size = 0x200, scoped, tag = 'prefetched SMEM operand 1']
  %s0 = inlined_call_operand.vmem [shape: s32[5], index: 0, kind: input, shape index: {}]
  %s1 = inlined_call_operand.vmem [shape: s32[5], index: 1, kind: input, shape index: {}]
  %s2 = inlined_call_operand.vmem [shape: bf16[80,32], index: 2, kind: input, shape index: {}]
  %s3 = inlined_call_operand.vmem [shape: bf16[4,1,32,128], index: 3, kind: input, shape index: {}]
  %s4 = inlined_call_operand.vmem [shape: bf16[4,64,32], index: 4, kind: input, shape index: {}]
  %s5 = inlined_call_operand.vmem [shape: f32[80,1], index: 5, kind: input, shape index: {}]
  %s6 = inlined_call_operand.vmem [shape: f32[80,32], index: 6, kind: output, shape index: {}]
  %s7 = sld [smem:[#allocation0]]
  $region61: #{block_sparse_mlp_forward.3} parent=0
    _
  %s9 = ssub.s32 1, %s7
  %s10 = scalar_select 0, %s9, %s7
  %s11 = sshll.u32 %s0, 4
  %s12 = int_to_ptr.vmem [resolvable:$true] %s11
  %14 = dma.vmem_to_smem %s12, 16, [#allocation4], [#allocation3]
  %s15 = sshll.u32 %s1, 4
  %s16 = int_to_ptr.vmem [resolvable:$true] %s15
  %18 = dma.vmem_to_smem %s16, 16, [#allocation5], [#allocation3]
  %19 = dma.done [#allocation3], 32
  %20 = sfence
  loop: start=0, step=1, limit=7
  $region2: #{block_sparse_mlp_forward.3} parent=0 // loop_pre_header
    _
  $region3: #{block_sparse_mlp_forward.3} parent=0 // loop_header
    %s22 = sphi 0, %s26
    %p23 = scmp.ge.s32.totalorder %s22, 7
    %s29 = sphi 0, %s41
    %s30 = sphi 0, %s37
    %s31 = sphi 0, %s29
    %s32 = sphi 0, %s30
    %s33 = sphi 0, %s31
    %s34 = sphi 0, %s32
    %s44 = sphi 0, %s46
    %s47 = sphi 0, %s44
    %s48 = sphi 0, %s47
    %s64 = sphi 0, %s48
    %s78 = sphi 0, %s80
    %s81 = sphi 0, %s78
    %s82 = sphi 0, %s81
    %s98 = sphi 0, %s82
    %s112 = sphi 0, %s114
    %s115 = sphi 0, %s112
    %s116 = sphi 0, %s115
    %s132 = sphi 0, %s116
    %s138 = sphi 0, %s140
    %s141 = sphi 0, %s138
    %s142 = sphi 0, %s141
    %s158 = sphi 0, %s142
    %s164 = sphi 0, %s166
    %s167 = sphi 0, %s164
    %s168 = sphi 0, %s167
    %s184 = sphi 0, %s168
  $region4: #{block_sparse_mlp_forward.3} parent=0 // loop_header_branch
    %25 = sbr.rel (%p23) target = $region8
  $region5: #{block_sparse_mlp_forward.3} parent=0 // loop_body
    %s27 = ssub.s32 %s22, 1
    %s28 = ssub.s32 %s22, 2
    %s35 = sadd.s32 1, %s30
    %p36 = scmp.ge.s32.totalorder %s35, 1
    %s37 = scalar_select %p36, 0, %s35
    %s38 = sadd.s32 1, %s29
    %s39 = scalar_select %p36, %s38, %s29
    %p40 = scmp.ge.s32.totalorder %s39, 5
    %s41 = scalar_select %p40, 0, %s39
    %s42 = ssub.s32 %s29, %s41
    %p43 = scmp.eq.s32.totalorder %s42, 0
    %s45 = sadd.s32 %s44, 1
    %s46 = scalar_select %p43, %s44, %s45
    %p49 = pneg %p43
    %p50 = scmp.eq.s32.totalorder %s22, 4
    %p51 = por %p49, %p50
    %p52 = scmp.ne.s32.totalorder %s44, %s47
    %p53 = scmp.eq.s32.totalorder %s22, 0
    %p54 = por %p52, %p53
    %p55 = scmp.ne.s32.totalorder %s44, %s47
    %p56 = scmp.eq.s32.totalorder %s27, 4
    %p57 = por %p55, %p56
    %p58 = scmp.ne.s32.totalorder %s47, %s48
    %p59 = scmp.eq.s32.totalorder %s27, 0
    %p60 = por %p58, %p59
    %p61 = scmp.ne.s32.totalorder %s47, %s48
    %p62 = scmp.eq.s32.totalorder %s28, 4
    %p63 = por %p61, %p62
    %p65 = scmp.ne.s32.totalorder %s48, %s64
    %p66 = scmp.eq.s32.totalorder %s28, 0
    %p67 = por %p65, %p66
    %s68 = sld [smem:[#allocation4 + %s29]]
    %s69 = sld [smem:[#allocation5 + %s29]]
    %s70 = smul.u32 %s30, %s69
    %s71 = sld [smem:[#allocation4 + %s41]]
    %s72 = sld [smem:[#allocation5 + %s41]]
    %s73 = smul.u32 %s37, %s72
    %s74 = ssub.s32 %s68, %s71
    %s75 = ssub.s32 %s70, %s73
    %s76 = sor.u32 %s74, %s75
    %p77 = scmp.eq.s32.totalorder %s76, 0
    %s79 = sadd.s32 %s78, 1
    %s80 = scalar_select %p77, %s78, %s79
    %p83 = pneg %p77
    %p84 = scmp.eq.s32.totalorder %s22, 4
    %p85 = por %p83, %p84
    %p86 = scmp.ne.s32.totalorder %s78, %s81
    %p87 = scmp.eq.s32.totalorder %s22, 0
    %p88 = por %p86, %p87
    %p89 = scmp.ne.s32.totalorder %s78, %s81
    %p90 = scmp.eq.s32.totalorder %s27, 4
    %p91 = por %p89, %p90
    %p92 = scmp.ne.s32.totalorder %s81, %s82
    %p93 = scmp.eq.s32.totalorder %s27, 0
    %p94 = por %p92, %p93
    %p95 = scmp.ne.s32.totalorder %s81, %s82
    %p96 = scmp.eq.s32.totalorder %s28, 4
    %p97 = por %p95, %p96
    %p99 = scmp.ne.s32.totalorder %s82, %s98
    %p100 = scmp.eq.s32.totalorder %s28, 0
    %p101 = por %p99, %p100
    %s102 = sld [smem:[#allocation4 + %s29]]
    %s103 = sld [smem:[#allocation5 + %s29]]
    %s104 = smul.u32 %s30, %s103
    %s105 = sld [smem:[#allocation4 + %s41]]
    %s106 = sld [smem:[#allocation5 + %s41]]
    %s107 = smul.u32 %s37, %s106
    %s108 = ssub.s32 %s102, %s105
    %s109 = ssub.s32 %s104, %s107
    %s110 = sor.u32 %s108, %s109
    %p111 = scmp.eq.s32.totalorder %s110, 0
    %s113 = sadd.s32 %s112, 1
    %s114 = scalar_select %p111, %s112, %s113
    %p117 = pneg %p111
    %p118 = scmp.eq.s32.totalorder %s22, 4
    %p119 = por %p117, %p118
    %p120 = scmp.ne.s32.totalorder %s112, %s115
    %p121 = scmp.eq.s32.totalorder %s22, 0
    %p122 = por %p120, %p121
    %p123 = scmp.ne.s32.totalorder %s112, %s115
    %p124 = scmp.eq.s32.totalorder %s27, 4
    %p125 = por %p123, %p124
    %p126 = scmp.ne.s32.totalorder %s115, %s116
    %p127 = scmp.eq.s32.totalorder %s27, 0
    %p128 = por %p126, %p127
    %p129 = scmp.ne.s32.totalorder %s115, %s116
    %p130 = scmp.eq.s32.totalorder %s28, 4
    %p131 = por %p129, %p130
    %p133 = scmp.ne.s32.totalorder %s116, %s132
    %p134 = scmp.eq.s32.totalorder %s28, 0
    %p135 = por %p133, %p134
    %s136 = ssub.s32 %s29, %s41
    %p137 = scmp.eq.s32.totalorder %s136, 0
    %s139 = sadd.s32 %s138, 1
    %s140 = scalar_select %p137, %s138, %s139
    %p143 = pneg %p137
    %p144 = scmp.eq.s32.totalorder %s22, 4
    %p145 = por %p143, %p144
    %p146 = scmp.ne.s32.totalorder %s138, %s141
    %p147 = scmp.eq.s32.totalorder %s22, 0
    %p148 = por %p146, %p147
    %p149 = scmp.ne.s32.totalorder %s138, %s141
    %p150 = scmp.eq.s32.totalorder %s27, 4
    %p151 = por %p149, %p150
    %p152 = scmp.ne.s32.totalorder %s141, %s142
    %p153 = scmp.eq.s32.totalorder %s27, 0
    %p154 = por %p152, %p153
    %p155 = scmp.ne.s32.totalorder %s141, %s142
    %p156 = scmp.eq.s32.totalorder %s28, 4
    %p157 = por %p155, %p156
    %p159 = scmp.ne.s32.totalorder %s142, %s158
    %p160 = scmp.eq.s32.totalorder %s28, 0
    %p161 = por %p159, %p160
    %s162 = ssub.s32 %s29, %s41
    %p163 = scmp.eq.s32.totalorder %s162, 0
    %s165 = sadd.s32 %s164, 1
    %s166 = scalar_select %p163, %s164, %s165
    %p169 = pneg %p163
    %p170 = scmp.eq.s32.totalorder %s22, 4
    %p171 = por %p169, %p170
    %p172 = scmp.ne.s32.totalorder %s164, %s167
    %p173 = scmp.eq.s32.totalorder %s22, 0
    %p174 = por %p172, %p173
    %p175 = scmp.ne.s32.totalorder %s164, %s167
    %p176 = scmp.eq.s32.totalorder %s27, 4
    %p177 = por %p175, %p176
    %p178 = scmp.ne.s32.totalorder %s167, %s168
    %p179 = scmp.eq.s32.totalorder %s27, 0
    %p180 = por %p178, %p179
    %p181 = scmp.ne.s32.totalorder %s167, %s168
    %p182 = scmp.eq.s32.totalorder %s28, 4
    %p183 = por %p181, %p182
    %p185 = scmp.ne.s32.totalorder %s168, %s184
    %p186 = scmp.eq.s32.totalorder %s28, 0
    %p187 = por %p185, %p186
    %p188 = scmp.le.s32.totalorder 1, %s22
    %p189 = scmp.lt.s32.totalorder %s22, 6
    %p190 = pnand %p188, %p189
    %p191 = pneg %p190
    // Predicated region
    $region9: #{block_sparse_mlp_forward.3} parent=5 // pred_check
      _
    $region10: #{block_sparse_mlp_forward.3} parent=5 // pred_check_branch
      %193 = sbr.rel (%p190) target = $region12
    $region11: #{block_sparse_mlp_forward.3} parent=5 // pred_region
      %s194 = ssub.s32 %s22, 1
    $region12: #{block_sparse_mlp_forward.3} parent=5 // pred_fallthru
      _
    %p195 = scmp.lt.s32.totalorder %s22, 5
    // Predicated region
    $region13: #{block_sparse_mlp_forward.3} parent=5 // pred_check
      %p196 = pneg %p195
    $region14: #{block_sparse_mlp_forward.3} parent=5 // pred_check_branch
      %198 = sbr.rel (%p196) target = $region16
    $region15: #{block_sparse_mlp_forward.3} parent=5 // pred_region
      // Predicated region
      $region17: #{block_sparse_mlp_forward.3} parent=15 // pred_check
        %p199 = pneg %p54
      $region18: #{block_sparse_mlp_forward.3} parent=15 // pred_check_branch
        %201 = sbr.rel (%p199) target = $region20
      $region19: #{block_sparse_mlp_forward.3} parent=15 // pred_region
        %s202 = smul.u32 2, %s29
        %p203 = scmp.lt.s32.totalorder %s202, 9
        %s204 = scalar_select %p203, %s202, 9
        %s205 = smul.addr %s204, 4
        %s206 = scalar_lea.vmem %s2, %s205
        %s207 = smul.u32 2, %s29
      $region20: #{block_sparse_mlp_forward.3} parent=15 // pred_fallthru
        _
      // Predicated region
      $region21: #{block_sparse_mlp_forward.3} parent=15 // pred_check
        %p208 = pneg %p88
      $region22: #{block_sparse_mlp_forward.3} parent=15 // pred_check_branch
        %210 = sbr.rel (%p208) target = $region24
      $region23: #{block_sparse_mlp_forward.3} parent=15 // pred_region
        %s211 = sld [smem:[#allocation4 + %s29]]
        %s212 = sld [smem:[#allocation5 + %s29]]
        %s213 = smul.u32 %s30, %s212
        %p214 = scmp.lt.s32.totalorder %s211, 3
        %s215 = scalar_select %p214, %s211, 3
        %p216 = scmp.lt.s32.totalorder %s213, 0
        %s217 = scalar_select %p216, %s213, 0
        %s218 = smul.addr %s217, 4
        %s219 = smul.addr %s215, 4
        %s220 = sadd.s32 %s218, %s219
        %s221 = smul.addr %s220, 4
        %s222 = scalar_lea.vmem %s3, %s221
        %s223 = sld [smem:[#allocation4 + %s29]]
        %s224 = sld [smem:[#allocation5 + %s29]]
        %s225 = smul.u32 %s30, %s224
      $region24: #{block_sparse_mlp_forward.3} parent=15 // pred_fallthru
        _
      // Predicated region
      $region25: #{block_sparse_mlp_forward.3} parent=15 // pred_check
        %p226 = pneg %p122
      $region26: #{block_sparse_mlp_forward.3} parent=15 // pred_check_branch
        %228 = sbr.rel (%p226) target = $region28
      $region27: #{block_sparse_mlp_forward.3} parent=15 // pred_region
        %s229 = sld [smem:[#allocation4 + %s29]]
        %s230 = sld [smem:[#allocation5 + %s29]]
        %s231 = smul.u32 %s30, %s230
        %s232 = smul.u32 8, %s231
        %p233 = scmp.lt.s32.totalorder %s229, 3
        %s234 = scalar_select %p233, %s229, 3
        %p235 = scmp.lt.s32.totalorder %s232, 7
        %s236 = scalar_select %p235, %s232, 7
        %s237 = smul.addr %s234, 8
        %s238 = sadd.s32 %s236, %s237
        %s239 = smul.addr %s238, 4
        %s240 = scalar_lea.vmem %s4, %s239
        %s241 = sld [smem:[#allocation4 + %s29]]
        %s242 = sld [smem:[#allocation5 + %s29]]
        %s243 = smul.u32 %s30, %s242
        %s244 = smul.u32 8, %s243
      $region28: #{block_sparse_mlp_forward.3} parent=15 // pred_fallthru
        _
      // Predicated region
      $region29: #{block_sparse_mlp_forward.3} parent=15 // pred_check
        %p245 = pneg %p148
      $region30: #{block_sparse_mlp_forward.3} parent=15 // pred_check_branch
        %247 = sbr.rel (%p245) target = $region32
      $region31: #{block_sparse_mlp_forward.3} parent=15 // pred_region
        %s248 = smul.u32 2, %s29
        %p249 = scmp.lt.s32.totalorder %s248, 9
        %s250 = scalar_select %p249, %s248, 9
        %s251 = smul.addr %s250, 8
        %s252 = scalar_lea.vmem %s5, %s251
        %s253 = smul.u32 2, %s29
      $region32: #{block_sparse_mlp_forward.3} parent=15 // pred_fallthru
        _
    $region16: #{block_sparse_mlp_forward.3} parent=5 // pred_fallthru
      _
    %p254 = scmp.le.s32.totalorder 1, %s22
    %p255 = scmp.lt.s32.totalorder %s22, 6
    %p256 = pnand %p254, %p255
    %p257 = pneg %p256
    // Predicated region
    $region33: #{block_sparse_mlp_forward.3} parent=5 // pred_check
      _
    $region34: #{block_sparse_mlp_forward.3} parent=5 // pred_check_branch
      %259 = sbr.rel (%p256) target = $region36
    $region35: #{block_sparse_mlp_forward.3} parent=5 // pred_region
      %s260 = ssub.s32 %s22, 1
      %s261 = smul.u32 2, %s31
      %p262 = scmp.lt.s32.totalorder %s261, 9
      %s263 = scalar_select %p262, %s261, 9
      %s264 = smul.addr %s263, 4
      %s265 = scalar_lea.vmem %s2, %s264
      %p266 = pneg %p60
      %p267 = pneg %p57
      %s268 = sld [smem:[#allocation4 + %s31]]
      %s269 = sld [smem:[#allocation5 + %s31]]
      %s270 = smul.u32 %s32, %s269
      %p271 = scmp.lt.s32.totalorder %s268, 3
      %s272 = scalar_select %p271, %s268, 3
      %p273 = scmp.lt.s32.totalorder %s270, 0
      %s274 = scalar_select %p273, %s270, 0
      %s275 = smul.addr %s274, 4
      %s276 = smul.addr %s272, 4
      %s277 = sadd.s32 %s275, %s276
      %s278 = smul.addr %s277, 4
      %s279 = scalar_lea.vmem %s3, %s278
      %p280 = pneg %p94
      %p281 = pneg %p91
      %s282 = sld [smem:[#allocation4 + %s31]]
      %s283 = sld [smem:[#allocation5 + %s31]]
      %s284 = smul.u32 %s32, %s283
      %s285 = smul.u32 8, %s284
      %p286 = scmp.lt.s32.totalorder %s282, 3
      %s287 = scalar_select %p286, %s282, 3
      %p288 = scmp.lt.s32.totalorder %s285, 7
      %s289 = scalar_select %p288, %s285, 7
      %s290 = smul.addr %s287, 8
      %s291 = sadd.s32 %s289, %s290
      %s292 = smul.addr %s291, 4
      %s293 = scalar_lea.vmem %s4, %s292
      %p294 = pneg %p128
      %p295 = pneg %p125
      %s296 = smul.u32 2, %s31
      %p297 = scmp.lt.s32.totalorder %s296, 9
      %s298 = scalar_select %p297, %s296, 9
      %s299 = smul.addr %s298, 8
      %s300 = scalar_lea.vmem %s5, %s299
      %p301 = pneg %p154
      %p302 = pneg %p151
      %p303 = pneg %p180
      %p304 = pneg %p177
      %s305 = smul.u32 2, %s31
      %p306 = scmp.lt.s32.totalorder %s305, 9
      %s307 = scalar_select %p306, %s305, 9
      %s308 = smul.addr %s307, 8
      %s309 = scalar_lea.vmem %s6, %s308
      %s310 = smul.u32 2, %s31
      %p311 = scmp.lt.s32.totalorder %s310, 9
      %s312 = scalar_select %p311, %s310, 9
      %s313 = smul.addr %s312, 4
      %s314 = scalar_lea.vmem %s2, %s313
      %s315 = smul.u32 2, %s31
      %s316 = sld [smem:[#allocation4 + %s31]]
      %s317 = sld [smem:[#allocation5 + %s31]]
      %s318 = smul.u32 %s32, %s317
      %p319 = scmp.lt.s32.totalorder %s316, 3
      %s320 = scalar_select %p319, %s316, 3
      %p321 = scmp.lt.s32.totalorder %s318, 0
      %s322 = scalar_select %p321, %s318, 0
      %s323 = smul.addr %s322, 4
      %s324 = smul.addr %s320, 4
      %s325 = sadd.s32 %s323, %s324
      %s326 = smul.addr %s325, 4
      %s327 = scalar_lea.vmem %s3, %s326
      %s328 = sld [smem:[#allocation4 + %s31]]
      %s329 = sld [smem:[#allocation5 + %s31]]
      %s330 = smul.u32 %s32, %s329
      %s331 = sld [smem:[#allocation4 + %s31]]
      %s332 = sld [smem:[#allocation5 + %s31]]
      %s333 = smul.u32 %s32, %s332
      %s334 = smul.u32 8, %s333
      %p335 = scmp.lt.s32.totalorder %s331, 3
      %s336 = scalar_select %p335, %s331, 3
      %p337 = scmp.lt.s32.totalorder %s334, 7
      %s338 = scalar_select %p337, %s334, 7
      %s339 = smul.addr %s336, 8
      %s340 = sadd.s32 %s338, %s339
      %s341 = smul.addr %s340, 4
      %s342 = scalar_lea.vmem %s4, %s341
      %s343 = sld [smem:[#allocation4 + %s31]]
      %s344 = sld [smem:[#allocation5 + %s31]]
      %s345 = smul.u32 %s32, %s344
      %s346 = smul.u32 8, %s345
      %s347 = smul.u32 2, %s31
      %p348 = scmp.lt.s32.totalorder %s347, 9
      %s349 = scalar_select %p348, %s347, 9
      %s350 = smul.addr %s349, 8
      %s351 = scalar_lea.vmem %s5, %s350
      %s352 = smul.u32 2, %s31
      %s353 = smul.u32 2, %s31
      %p354 = scmp.lt.s32.totalorder %s353, 9
      %s355 = scalar_select %p354, %s353, 9
      %s356 = smul.addr %s355, 8
      %s357 = scalar_lea.vmem %s6, %s356
      %s358 = smul.u32 2, %s31
      %p360 = scmp.eq.s32.totalorder %s32, 0
      // Predicated region
      $region37: #{block_sparse_mlp_forward.3} parent=35 // pred_check
        %p361 = pneg %p360
      $region38: #{block_sparse_mlp_forward.3} parent=35 // pred_check_branch
        %363 = sbr.rel (%p361) target = $region40
      $region39: #{block_sparse_mlp_forward.3} parent=35 // pred_region
        %vm364 = vcmask 261120
        %365 = vst.msk [vmem:[#allocation2] sm:$0xff] %vm364, 0.0
        %366 = vst.msk [vmem:[#allocation2 + $0x8] sm:$0xff] %vm364, 0.0
      $region40: #{block_sparse_mlp_forward.3} parent=35 // pred_fallthru
        _
      %s367 = sld [smem:[#allocation5 + %s31]]
      %p368 = scmp.gt.s32.totalorder %s367, 0
      // Predicated region
      $region41: #{block_sparse_mlp_forward.3} parent=35 // pred_check
        %p369 = pneg %p368
      $region42: #{block_sparse_mlp_forward.3} parent=35 // pred_check_branch
        %371 = sbr.rel (%p369) target = $region44
      $region43: #{block_sparse_mlp_forward.3} parent=35 // pred_region
        %v372 = vld [vmem:[%s314] sm:$0xf]
        %v373 = vld [vmem:[%s314 + $0x4] sm:$0xf]
        %v374 = vld [vmem:[%s327] sm:$0xf]
        %v375 = vld [vmem:[%s327 + $0x4] sm:$0xf]
        %v376 = vld [vmem:[%s327 + $0x8] sm:$0xf]
        %v377 = vld [vmem:[%s327 + $0xc] sm:$0xf]
        %v380 = vunpack.c.l.b16 %v372
        %v381 = vunpack.c.l.b16 %v373
        %v382 = vpack.c.b16 %v381, %v380
        %v387 = vunpack.c.l.b16 %v374
        %v388 = vunpack.c.l.b16 %v375
        %v389 = vunpack.c.l.b16 %v376
        %v390 = vunpack.c.l.b16 %v377
        %v391 = vpack.c.b16 %v388, %v387
        %v392 = vpack.c.b16 %v390, %v389
        %vm395 = vcmask 261120
        %v397 = vsel %vm395, %v382, 0
        %399 = vmatprep.subr.bf16.mxu0 0
        %400 = vmatpush1.bf16.msra.mxu0 %v391
        %401 = vmatprep.subr.bf16.mxu0 0
        %402 = vmatpush1.bf16.msra.mxu0 %v392
        %403 = vmatprep.subr.bf16.mxu0 0
        %404 = vmatpush1.bf16.msra.mxu0 0
        %405 = vmatprep.subr.bf16.mxu0 0
        %406 = vmatpush1.bf16.msra.mxu0 0
        %407 = vmatprep.subr.bf16.mxu0 0
        %408 = vmatpush1.bf16.msra.mxu0 0
        %409 = vmatprep.subr.bf16.mxu0 0
        %410 = vmatpush1.bf16.msra.mxu0 0
        %411 = vmatprep.subr.bf16.mxu0 0
        %412 = vmatpush1.bf16.msra.mxu0 0
        %413 = vmatprep.subr.bf16.mxu0 0
        %414 = vmatpush1.bf16.msra.mxu0 0
        %415 = vmatprep.subr.bf16.mxu0 0
        %416 = vmatpush1.bf16.msra.mxu0 0
        %417 = vmatprep.subr.bf16.mxu0 0
        %418 = vmatpush1.bf16.msra.mxu0 0
        %419 = vmatprep.subr.bf16.mxu0 0
        %420 = vmatpush1.bf16.msra.mxu0 0
        %421 = vmatprep.subr.bf16.mxu0 0
        %422 = vmatpush1.bf16.msra.mxu0 0
        %423 = vmatprep.subr.bf16.mxu0 0
        %424 = vmatpush1.bf16.msra.mxu0 0
        %425 = vmatprep.subr.bf16.mxu0 0
        %426 = vmatpush1.bf16.msra.mxu0 0
        %427 = vmatprep.subr.bf16.mxu0 0
        %428 = vmatpush1.bf16.msra.mxu0 0
        %429 = vmatprep.subr.bf16.mxu0 0
        %430 = vmatpush1.bf16.msra.mxu0 0
        %431 = vmatprep.mubr.bf16.mxu0 0
        %432 = vmatmul.mubr.bf16.gmra.mrb[0].mxu0 %v397
        %v433 = vpop.f32.mrb[0].mxu0
        %v434 = vadd.f32 0.0, %v433
        %v435 = vpop.f32.mrb[0].mxu0
        %v436 = vpop.f32.mrb[0].mxu0
        %v437 = vadd.f32 0.0, %v436
        %v438 = vpop.f32.mrb[0].mxu0
        %439 = vdwg.mxu0
        %v440 = vxor.u32 %v434, 2147483648
        %v441 = vxor.u32 %v437, 2147483648
        %v442 = vmul.f32 %v440, 1.442695
        %v443 = vpow.pop %v442
        %v444 = vmul.f32 %v441, 1.442695
        %v445 = vpow.pop %v444
        %v446 = vadd.f32 %v443, 1.0
        %v447 = vadd.f32 %v445, 1.0
        %v448 = vrcp.pop %v446
        %v449 = vmul.f32 1.0, %v448
        %v450 = vrcp.pop %v447
        %v451 = vmul.f32 1.0, %v450
        %v452 = vmul.f32 %v434, %v449
        %v453 = vmul.f32 %v437, %v451
        %456 = vrot.lane.b32.xlu0 %v434, 64
        %v457 = vpop.permute.xlu0 %456
        %458 = vrot.lane.b32.xlu0 %v437, 64
        %v459 = vpop.permute.xlu0 %458
        %v462 = vmul.f32 %v452, %v457
        %v463 = vmul.f32 %v453, %v459
        %v464 = vld [vmem:[%s351] sm:$0xff]
        %v465 = vld [vmem:[%s351 + $0x8] sm:$0xff]
        %467 = vset.pattern.permute.xlu0 0
        %468 = vperm.xlu0 %467, %v464
        %v469 = vpop.permute.xlu0 %468
        %472 = vset.pattern.permute.xlu0 0
        %473 = vperm.xlu0 %472, %v465
        %v474 = vpop.permute.xlu0 %473
        %v476 = vmul.f32 %v462, %v469
        %v477 = vmul.f32 %v463, %v474
        %v478 = vld [vmem:[#allocation2] sm:$0xff]
        %v479 = vld [vmem:[#allocation2 + $0x8] sm:$0xff]
        %v480 = vpack.c.bf16 %v477, %v476
        %v481 = vld [vmem:[%s342] sm:$0xf]
        %v482 = vld [vmem:[%s342 + $0x4] sm:$0xf]
        %v483 = vld [vmem:[%s342 + $0x8] sm:$0xf]
        %v484 = vld [vmem:[%s342 + $0xc] sm:$0xf]
        %v485 = vld [vmem:[%s342 + $0x10] sm:$0xf]
        %v486 = vld [vmem:[%s342 + $0x14] sm:$0xf]
        %v487 = vld [vmem:[%s342 + $0x18] sm:$0xf]
        %v488 = vld [vmem:[%s342 + $0x1c] sm:$0xf]
        %v497 = vunpack.c.l.b16 %v481
        %v498 = vunpack.c.l.b16 %v482
        %v499 = vunpack.c.l.b16 %v483
        %v500 = vunpack.c.l.b16 %v484
        %v501 = vunpack.c.l.b16 %v485
        %v502 = vunpack.c.l.b16 %v486
        %v503 = vunpack.c.l.b16 %v487
        %v504 = vunpack.c.l.b16 %v488
        %v505 = vpack.c.b16 %v498, %v497
        %v506 = vpack.c.b16 %v500, %v499
        %v507 = vpack.c.b16 %v502, %v501
        %v508 = vpack.c.b16 %v504, %v503
        %vm513 = vcmask 523264
        %v515 = vsel %vm513, %v480, 0
        %517 = vmatprep.subr.bf16.mxu0 0
        %518 = vmatpush1.bf16.msra.mxu0 %v505
        %519 = vmatprep.subr.bf16.mxu0 0
        %520 = vmatpush1.bf16.msra.mxu0 %v506
        %521 = vmatprep.subr.bf16.mxu0 0
        %522 = vmatpush1.bf16.msra.mxu0 %v507
        %523 = vmatprep.subr.bf16.mxu0 0
        %524 = vmatpush1.bf16.msra.mxu0 %v508
        %525 = vmatprep.subr.bf16.mxu0 0
        %526 = vmatpush1.bf16.msra.mxu0 0
        %527 = vmatprep.subr.bf16.mxu0 0
        %528 = vmatpush1.bf16.msra.mxu0 0
        %529 = vmatprep.subr.bf16.mxu0 0
        %530 = vmatpush1.bf16.msra.mxu0 0
        %531 = vmatprep.subr.bf16.mxu0 0
        %532 = vmatpush1.bf16.msra.mxu0 0
        %533 = vmatprep.subr.bf16.mxu0 0
        %534 = vmatpush1.bf16.msra.mxu0 0
        %535 = vmatprep.subr.bf16.mxu0 0
        %536 = vmatpush1.bf16.msra.mxu0 0
        %537 = vmatprep.subr.bf16.mxu0 0
        %538 = vmatpush1.bf16.msra.mxu0 0
        %539 = vmatprep.subr.bf16.mxu0 0
        %540 = vmatpush1.bf16.msra.mxu0 0
        %541 = vmatprep.subr.bf16.mxu0 0
        %542 = vmatpush1.bf16.msra.mxu0 0
        %543 = vmatprep.subr.bf16.mxu0 0
        %544 = vmatpush1.bf16.msra.mxu0 0
        %545 = vmatprep.subr.bf16.mxu0 0
        %546 = vmatpush1.bf16.msra.mxu0 0
        %547 = vmatprep.subr.bf16.mxu0 0
        %548 = vmatpush1.bf16.msra.mxu0 0
        %549 = vmatprep.mubr.bf16.mxu0 0
        %550 = vmatmul.mubr.bf16.gmra.mrb[0].mxu0 %v515
        %v551 = vpop.f32.mrb[0].mxu0
        %v552 = vadd.f32 0.0, %v551
        %v553 = vpop.f32.mrb[0].mxu0
        %v554 = vpop.f32.mrb[0].mxu0
        %v555 = vadd.f32 0.0, %v554
        %v556 = vpop.f32.mrb[0].mxu0
        %557 = vdwg.mxu0
        %v558 = vadd.f32 %v478, %v552
        %v559 = vadd.f32 %v479, %v555
        %560 = vst.msk [vmem:[#allocation2] sm:$0xff] %vm395, %v558
        %561 = vst.msk [vmem:[#allocation2 + $0x8] sm:$0xff] %vm395, %v559
      $region44: #{block_sparse_mlp_forward.3} parent=35 // pred_fallthru
        _
      // Predicated region
      $region45: #{block_sparse_mlp_forward.3} parent=35 // pred_check
        %p562 = pneg %p360
      $region46: #{block_sparse_mlp_forward.3} parent=35 // pred_check_branch
        %564 = sbr.rel (%p562) target = $region48
      $region47: #{block_sparse_mlp_forward.3} parent=35 // pred_region
        %v565 = vld [vmem:[#allocation2] sm:$0xff]
        %v566 = vld [vmem:[#allocation2 + $0x8] sm:$0xff]
        %vm567 = vcmask 261120
        %568 = vst.msk [vmem:[%s357] sm:$0xff] %vm567, %v565
        %569 = vst.msk [vmem:[%s357 + $0x8] sm:$0xff] %vm567, %v566
      $region48: #{block_sparse_mlp_forward.3} parent=35 // pred_fallthru
        _
      %s570 = smul.u32 2, %s31
      %p571 = scmp.lt.s32.totalorder %s570, 9
      %s572 = scalar_select %p571, %s570, 9
      %s573 = smul.addr %s572, 8
      %s574 = scalar_lea.vmem %s6, %s573
      // Predicated region
      $region49: #{block_sparse_mlp_forward.3} parent=35 // pred_check
        %p575 = pneg %p177
      $region50: #{block_sparse_mlp_forward.3} parent=35 // pred_check_branch
        %577 = sbr.rel (%p575) target = $region52
      $region51: #{block_sparse_mlp_forward.3} parent=35 // pred_region
        %s578 = smul.u32 2, %s31
      $region52: #{block_sparse_mlp_forward.3} parent=35 // pred_fallthru
        _
    $region36: #{block_sparse_mlp_forward.3} parent=5 // pred_fallthru
      _
    %p579 = scmp.le.s32.totalorder 2, %s22
    // Predicated region
    $region53: #{block_sparse_mlp_forward.3} parent=5 // pred_check
      %p580 = pneg %p579
    $region54: #{block_sparse_mlp_forward.3} parent=5 // pred_check_branch
      %582 = sbr.rel (%p580) target = $region56
    $region55: #{block_sparse_mlp_forward.3} parent=5 // pred_region
      %s583 = ssub.s32 %s22, 2
      // Predicated region
      $region57: #{block_sparse_mlp_forward.3} parent=55 // pred_check
        %p584 = pneg %p183
      $region58: #{block_sparse_mlp_forward.3} parent=55 // pred_check_branch
        %586 = sbr.rel (%p584) target = $region60
      $region59: #{block_sparse_mlp_forward.3} parent=55 // pred_region
        %s587 = smul.u32 2, %s33
        %p588 = scmp.lt.s32.totalorder %s587, 9
        %s589 = scalar_select %p588, %s587, 9
        %s590 = smul.addr %s589, 8
        %s591 = scalar_lea.vmem %s6, %s590
      $region60: #{block_sparse_mlp_forward.3} parent=55 // pred_fallthru
        _
    $region56: #{block_sparse_mlp_forward.3} parent=5 // pred_fallthru
      _
  $region6: #{block_sparse_mlp_forward.3} parent=0 // loop_footer
    %s26 = sadd.s32 1, %s22
  $region7: #{block_sparse_mlp_forward.3} parent=0 // loop_footer_branch
    %21 = sbr.rel target = $region3
  $region8: #{block_sparse_mlp_forward.3} parent=0 // loop_exit
    _

</llo_original>
